<compile_context>
chip_gen: v6e
topology: v6e:2x2x1
jax: 0.10.0
libtpu: 0.0.40
codegen_flags: <defaults>
</compile_context>

<pallas_src>
import functools

import jax
import jax.numpy as jnp
from jax import lax
from jax.experimental import pallas as pl
from jax.experimental.pallas import tpu as pltpu


def _rcab_kernel(xw_ref, w1_ref, b1_ref, w2_ref, b2_ref, o_ref, patches_ref,
                 *, W, dil):
    """One (batch-block, row-tile) pair per grid step.

    xw_ref     : (Nb, 1, C, Win*W)  halo'd row window (Win = Th + 2*dil rows of
                                    the rows-padded image), spatially flattened
    w1_ref     : (C, 9*C)  conv1 weights, block-diagonal over groups;
                           column = tap*C + global_in_channel, tap = ky*3 + kx
    b1_ref     : (C, 1)    conv1 bias (f32)
    w2_ref     : (C, C)    1x1 conv weight (out, in)
    b2_ref     : (C, 1)    conv2 bias (f32)
    o_ref      : (Nb, C, Th*W)
    patches_ref: (9*C, Nb*Th*W) VMEM scratch -- the im2col matrix, written
                 tap-by-tap (no concat; halves peak live VMEM).
    """
    Nb, C, TW = o_ref.shape

    # Border masks hoisted out of the tap loops (computed once per step).
    col = lax.broadcasted_iota(jnp.int32, (1, TW), 1) % W
    mask_l = col >= dil          # tap kx=0 reads column c-dil  (valid: c >= dil)
    mask_r = col < (W - dil)     # tap kx=2 reads column c+dil  (valid: c < W-dil)

    pdt = patches_ref.dtype
    for nb in range(Nb):                      # static unroll; Nb is small
        c0 = nb * TW
        for ky in range(3):
            # Row-shifted window (kx = 1) = contiguous lane slice of the
            # halo'd, flattened window -- loaded directly from the input ref.
            base = xw_ref[nb, 0, :, ky * dil * W: ky * dil * W + TW]
            base = base.astype(jnp.float32)
            # Column shifts (kx = 0 / 2): lane rotation + per-row border mask
            # (the mask also zeroes the wrap-around across row boundaries).
            left = jnp.where(mask_l, jnp.roll(base, dil, axis=1), 0.0)
            right = jnp.where(mask_r, jnp.roll(base, -dil, axis=1), 0.0)
            r0 = (3 * ky) * C
            patches_ref[r0:r0 + C, c0:c0 + TW] = left.astype(pdt)        # kx=0
            patches_ref[r0 + C:r0 + 2 * C, c0:c0 + TW] = base.astype(pdt)  # kx=1
            patches_ref[r0 + 2 * C:r0 + 3 * C, c0:c0 + TW] = right.astype(pdt)  # kx=2

    # conv1 (dilated, grouped) as ONE fused matmul over K = 9C, + bias, ReLU.
    # TODO: for realistic C (>= 64) split this into two per-group matmuls
    # ((C/2, 9C/2) each) to avoid contracting over structural zeros, and
    # single-buffer the constant weight blocks (pl.Buffered(1) / copy-once).
    p = patches_ref[...]
    y = jnp.dot(w1_ref[...], p, preferred_element_type=jnp.float32)
    y = jnp.maximum(y + b1_ref[...], 0.0)
    # 1x1 conv + bias.
    y = jnp.dot(w2_ref[...], y.astype(w2_ref.dtype),
                preferred_element_type=jnp.float32)
    y = y + b2_ref[...]

    # Residual: the un-padded input tile = centre rows of the halo'd window,
    # re-sliced here (short live range) rather than kept across the matmuls.
    for nb in range(Nb):
        res = xw_ref[nb, 0, :, dil * W: dil * W + TW].astype(jnp.float32)
        o_ref[nb] = (y[:, nb * TW:(nb + 1) * TW] + res).astype(o_ref.dtype)


def rcab_pallas(x_nchw, w1, b1, w2, b2, *, groups=2, dilation=2,
                compute_dtype=jnp.float32):
    """x_nchw: (N, C, H, W).  Weights in PyTorch layouts:
       w1 (C, C//groups, 3, 3), b1 (C,), w2 (C, C, 1, 1), b2 (C,)."""
    N, C, H, W = x_nchw.shape
    dil = dilation
    cg = C // groups

    # ---- one-time weight/bias repacking (vectorized; no per-tap scatters) ----
    # conv1: (C_out, C_in/g, 3, 3) -> (C_out, 9*C_in), block-diagonal over
    # groups; column index = tap*C + global_in_channel, tap = ky*3 + kx.
    w1_r = jnp.transpose(w1.astype(jnp.float32).reshape(groups, cg, cg, 9),
                         (0, 1, 3, 2))                     # (g, out_l, tap, in_l)
    w1_packed = jnp.einsum('goti,gh->gothi', w1_r,
                           jnp.eye(groups, dtype=jnp.float32))
    w1_packed = w1_packed.reshape(C, 9 * C).astype(compute_dtype)
    w2_mat = w2[:, :, 0, 0].astype(compute_dtype)          # (C_out, C_in)
    b1_col = b1.reshape(C, 1).astype(jnp.float32)
    b2_col = b2.reshape(C, 1).astype(jnp.float32)

    # ---- VMEM budget from the physical device (75% headroom cap) ----
    try:
        vmem_cap = int(pltpu.get_tpu_info().vmem_capacity_bytes)
    except Exception:
        vmem_cap = 64 * 2 ** 20          # v7x-safe fallback
    budget = (3 * vmem_cap) // 4         # ~48 MiB on v7x, ~96 MiB on v5e/v6e

    isz = 4                              # f32 blocks; conservative for bf16

    def footprint(nb_, th_):
        tw, winw = th_ * W, (th_ + 2 * dil) * W
        return isz * (2 * nb_ * C * (winw + tw)        # double-buffered in/out
                      + 9 * C * nb_ * tw               # patches scratch
                      + 4 * C * nb_ * tw               # y + tap temporaries
                      + 2 * (9 * C * C + C * C + 2 * C))   # (dbl-buffered) weights

    # Row tile: largest divisor of H whose output tile stays lane-dense
    # (Th*W a multiple of 128, unmasked vst) and whose footprint fits.
    Th = H
    for d in sorted((d for d in range(1, H + 1) if H % d == 0), reverse=True):
        if (d == H or (d * W) % 128 == 0) and footprint(1, d) <= budget:
            Th = d
            break
    # (If nothing fit we keep Th = H; for huge odd-sized images pad H first.)

    # Batch blocking for the small-image regime: amortize per-step overhead
    # and widen the matmul lane extent (capped to keep vreg pressure modest).
    Nb = 1
    if Th == H:
        for d in sorted((d for d in range(1, N + 1) if N % d == 0), reverse=True):
            if d * H * W <= 4096 and footprint(d, Th) <= budget:
                Nb = d
                break

    T = H // Th
    TW = Th * W
    Win = Th + 2 * dil
    Hp = H + 2 * dil

    # ---- input: pad rows only; gather halo'd row windows (free when T == 1) --
    xp = jnp.pad(x_nchw, ((0, 0), (0, 0), (dil, dil), (0, 0)))
    if T == 1:
        xw = xp.reshape(N, 1, C, Hp * W)
    else:
        rows = jnp.arange(T)[:, None] * Th + jnp.arange(Win)[None, :]  # (T, Win)
        xw = jnp.transpose(xp[:, :, rows, :], (0, 2, 1, 3, 4))
        xw = xw.reshape(N, T, C, Win * W)

    fp = footprint(Nb, Th)
    vmem_limit = int(min(budget, max(32 * 2 ** 20, int(1.25 * fp) + (2 << 20))))

    kernel = functools.partial(_rcab_kernel, W=W, dil=dil)

    out_flat = pl.pallas_call(
        kernel,
        out_shape=jax.ShapeDtypeStruct((N, C, H * W), x_nchw.dtype),
        grid_spec=pltpu.PrefetchScalarGridSpec(
            num_scalar_prefetch=0,
            grid=(N // Nb, T),
            in_specs=[
                pl.BlockSpec((Nb, 1, C, Win * W), lambda n, t: (n, t, 0, 0)),
                pl.BlockSpec((C, 9 * C), lambda n, t: (0, 0)),
                pl.BlockSpec((C, 1), lambda n, t: (0, 0)),
                pl.BlockSpec((C, C), lambda n, t: (0, 0)),
                pl.BlockSpec((C, 1), lambda n, t: (0, 0)),
            ],
            out_specs=pl.BlockSpec((Nb, C, TW), lambda n, t: (n, 0, t)),
            scratch_shapes=[pltpu.VMEM((9 * C, Nb * TW), compute_dtype)],
        ),
        compiler_params=pltpu.CompilerParams(
            dimension_semantics=("parallel", "parallel"),
            vmem_limit_bytes=vmem_limit,
        ),
    )(xw, w1_packed, b1_col, w2_mat, b2_col)

    # Free metadata reshape back to NCHW.
    return out_flat.reshape(N, C, H, W)


def rcab_reference(x, w1, b1, w2, b2):
    """Pure-JAX reference matching the PyTorch module (NCHW)."""
    y = lax.conv_general_dilated(
        x, w1, window_strides=(1, 1), padding=((2, 2), (2, 2)),
        rhs_dilation=(2, 2), feature_group_count=2,
        dimension_numbers=("NCHW", "OIHW", "NCHW"))
    y = y + b1.reshape(1, -1, 1, 1)
    y = jnp.maximum(y, 0.0)
    y = lax.conv_general_dilated(
        y, w2, window_strides=(1, 1), padding=((0, 0), (0, 0)),
        dimension_numbers=("NCHW", "OIHW", "NCHW"))
    y = y + b2.reshape(1, -1, 1, 1)
    return y + x


if __name__ == "__main__":
    N, C, H, W = 2, 4, 16, 16
    key = jax.random.PRNGKey(0)
    kx, k1, kb1, k2, kb2 = jax.random.split(key, 5)

    x = jax.random.normal(kx, (N, C, H, W), jnp.float32)
    # PyTorch parameter shapes:
    w1 = jax.random.normal(k1, (C, C // 2, 3, 3), jnp.float32) * 0.1   # groups=2
    b1 = jax.random.normal(kb1, (C,), jnp.float32) * 0.1
    w2 = jax.random.normal(k2, (C, C, 1, 1), jnp.float32) * 0.1
    b2 = jax.random.normal(kb2, (C,), jnp.float32) * 0.1

    out = jax.block_until_ready(rcab_pallas(x, w1, b1, w2, b2))
    ref = jax.block_until_ready(rcab_reference(x, w1, b1, w2, b2))

    assert out.shape == (N, C, H, W)
    err = float(jnp.max(jnp.abs(out - ref)))
    assert jnp.allclose(out, ref, atol=1e-4, rtol=1e-4), f"max abs err {err}"
    print("KERNEL_OK")
</pallas_src>

<mosaic_0001>
module attributes {stable_mosaic.version = 11 : i64} {
  func.func @_rcab_kernel(%arg0: i32, %arg1: i32, %arg2: memref<2x1x4x320xf32, #tpu.memory_space<vmem>>, %arg3: memref<4x36xf32, #tpu.memory_space<vmem>>, %arg4: memref<4x1xf32, #tpu.memory_space<vmem>>, %arg5: memref<4x4xf32, #tpu.memory_space<vmem>>, %arg6: memref<4x1xf32, #tpu.memory_space<vmem>>, %arg7: memref<2x4x256xf32, #tpu.memory_space<vmem>>, %arg8: memref<36x512xf32, #tpu.memory_space<vmem>>) attributes {dimension_semantics = [#tpu.dimension_semantics<parallel>, #tpu.dimension_semantics<parallel>], iteration_bounds = array<i64: 1, 1>, scalar_prefetch = 0 : i64, scratch_operands = 1 : i64, tpu.core_type = #tpu.core_type<tc>, window_params = [{transform_indices = @transform_0, window_bounds = array<i64: 2, 1, 4, 320>}, {pipeline_mode = #tpu.pipeline_mode<synchronous>, transform_indices = @transform_1, window_bounds = array<i64: 4, 36>}, {pipeline_mode = #tpu.pipeline_mode<synchronous>, transform_indices = @transform_2, window_bounds = array<i64: 4, 1>}, {pipeline_mode = #tpu.pipeline_mode<synchronous>, transform_indices = @transform_3, window_bounds = array<i64: 4, 4>}, {pipeline_mode = #tpu.pipeline_mode<synchronous>, transform_indices = @transform_4, window_bounds = array<i64: 4, 1>}, {transform_indices = @transform_5, window_bounds = array<i64: 2, 4, 256>}]} {
    %0 = tpu.iota {dimensions = array<i32: 1>} : vector<1x256xi32>
    %c16_i32 = arith.constant 16 : i32
    %c0_i32 = arith.constant 0 : i32
    %1 = arith.cmpi eq, %c16_i32, %c0_i32 : i32
    %c1_i32 = arith.constant 1 : i32
    %2 = arith.select %1, %c1_i32, %c16_i32 : i32
    %3 = vector.broadcast %2 : i32 to vector<1x256xi32>
    %4 = arith.remsi %0, %3 : vector<1x256xi32>
    %c0_i32_0 = arith.constant 0 : i32
    %5 = vector.broadcast %c0_i32_0 : i32 to vector<1x256xi32>
    %6 = arith.cmpi ne, %4, %5 : vector<1x256xi32>
    %c0_i32_1 = arith.constant 0 : i32
    %7 = vector.broadcast %c0_i32_1 : i32 to vector<1x256xi32>
    %8 = arith.cmpi slt, %4, %7 : vector<1x256xi32>
    %c0_i32_2 = arith.constant 0 : i32
    %9 = arith.cmpi slt, %2, %c0_i32_2 : i32
    %10 = vector.broadcast %9 : i1 to vector<1x256xi1>
    %11 = vector.broadcast %10 : vector<1x256xi1> to vector<1x256xi1>
    %12 = arith.xori %8, %11 : vector<1x256xi1>
    %13 = arith.andi %12, %6 : vector<1x256xi1>
    %14 = vector.broadcast %2 : i32 to vector<1x256xi32>
    %15 = arith.addi %4, %14 : vector<1x256xi32>
    %16 = arith.select %13, %15, %4 : vector<1x256xi1>, vector<1x256xi32>
    %c2_i32 = arith.constant 2 : i32
    %17 = vector.broadcast %c2_i32 : i32 to vector<1x256xi32>
    %18 = arith.cmpi sge, %16, %17 : vector<1x256xi32>
    %c14_i32 = arith.constant 14 : i32
    %19 = vector.broadcast %c14_i32 : i32 to vector<1x256xi32>
    %20 = arith.cmpi slt, %16, %19 : vector<1x256xi32>
    %c0 = arith.constant 0 : index
    %c0_3 = arith.constant 0 : index
    %c0_4 = arith.constant 0 : index
    %c0_5 = arith.constant 0 : index
    %21 = vector.load %arg2[%c0, %c0_3, %c0_4, %c0_5] : memref<2x1x4x320xf32, #tpu.memory_space<vmem>>, vector<1x1x4x256xf32>
    %22 = vector.shape_cast %21 : vector<1x1x4x256xf32> to vector<4x256xf32>
    %23 = vector.extract_strided_slice %22 {offsets = [0, 254], sizes = [4, 2], strides = [1, 1]} : vector<4x256xf32> to vector<4x2xf32>
    %24 = vector.extract_strided_slice %22 {offsets = [0, 0], sizes = [4, 254], strides = [1, 1]} : vector<4x256xf32> to vector<4x254xf32>
    %25 = tpu.concatenate %23, %24 in 1 : vector<4x2xf32>, vector<4x254xf32> -> vector<4x256xf32>
    %cst = arith.constant 0.000000e+00 : f32
    %26 = vector.shape_cast %18 : vector<1x256xi1> to vector<1x256xi1>
    %27 = vector.broadcast %26 : vector<1x256xi1> to vector<4x256xi1>
    %28 = vector.broadcast %cst : f32 to vector<4x256xf32>
    %29 = arith.select %27, %25, %28 : vector<4x256xi1>, vector<4x256xf32>
    %30 = vector.extract_strided_slice %22 {offsets = [0, 2], sizes = [4, 254], strides = [1, 1]} : vector<4x256xf32> to vector<4x254xf32>
    %31 = vector.extract_strided_slice %22 {offsets = [0, 0], sizes = [4, 2], strides = [1, 1]} : vector<4x256xf32> to vector<4x2xf32>
    %32 = tpu.concatenate %30, %31 in 1 : vector<4x254xf32>, vector<4x2xf32> -> vector<4x256xf32>
    %cst_6 = arith.constant 0.000000e+00 : f32
    %33 = vector.shape_cast %20 : vector<1x256xi1> to vector<1x256xi1>
    %34 = vector.broadcast %33 : vector<1x256xi1> to vector<4x256xi1>
    %35 = vector.broadcast %cst_6 : f32 to vector<4x256xf32>
    %36 = arith.select %34, %32, %35 : vector<4x256xi1>, vector<4x256xf32>
    %c0_7 = arith.constant 0 : index
    %c0_8 = arith.constant 0 : index
    %37 = vector.load %arg8[%c0_7, %c0_8] : memref<36x512xf32, #tpu.memory_space<vmem>>, vector<4x256xf32>
    tpu.vector_store %arg8[%c0_7, %c0_8], %29 {strides = array<i32>} : memref<36x512xf32, #tpu.memory_space<vmem>>, vector<4x256xf32>,
    %c4 = arith.constant 4 : index
    %c0_9 = arith.constant 0 : index
    %38 = vector.load %arg8[%c4, %c0_9] : memref<36x512xf32, #tpu.memory_space<vmem>>, vector<4x256xf32>
    tpu.vector_store %arg8[%c4, %c0_9], %22 {strides = array<i32>} : memref<36x512xf32, #tpu.memory_space<vmem>>, vector<4x256xf32>,
    %c8 = arith.constant 8 : index
    %c0_10 = arith.constant 0 : index
    %39 = vector.load %arg8[%c8, %c0_10] : memref<36x512xf32, #tpu.memory_space<vmem>>, vector<4x256xf32>
    tpu.vector_store %arg8[%c8, %c0_10], %36 {strides = array<i32>} : memref<36x512xf32, #tpu.memory_space<vmem>>, vector<4x256xf32>,
    %c0_11 = arith.constant 0 : index
    %c0_12 = arith.constant 0 : index
    %c0_13 = arith.constant 0 : index
    %c32 = arith.constant 32 : index
    %40 = vector.load %arg2[%c0_11, %c0_12, %c0_13, %c32] : memref<2x1x4x320xf32, #tpu.memory_space<vmem>>, vector<1x1x4x256xf32>
    %41 = vector.shape_cast %40 : vector<1x1x4x256xf32> to vector<4x256xf32>
    %42 = vector.extract_strided_slice %41 {offsets = [0, 254], sizes = [4, 2], strides = [1, 1]} : vector<4x256xf32> to vector<4x2xf32>
    %43 = vector.extract_strided_slice %41 {offsets = [0, 0], sizes = [4, 254], strides = [1, 1]} : vector<4x256xf32> to vector<4x254xf32>
    %44 = tpu.concatenate %42, %43 in 1 : vector<4x2xf32>, vector<4x254xf32> -> vector<4x256xf32>
    %cst_14 = arith.constant 0.000000e+00 : f32
    %45 = vector.shape_cast %18 : vector<1x256xi1> to vector<1x256xi1>
    %46 = vector.broadcast %45 : vector<1x256xi1> to vector<4x256xi1>
    %47 = vector.broadcast %cst_14 : f32 to vector<4x256xf32>
    %48 = arith.select %46, %44, %47 : vector<4x256xi1>, vector<4x256xf32>
    %49 = vector.extract_strided_slice %41 {offsets = [0, 2], sizes = [4, 254], strides = [1, 1]} : vector<4x256xf32> to vector<4x254xf32>
    %50 = vector.extract_strided_slice %41 {offsets = [0, 0], sizes = [4, 2], strides = [1, 1]} : vector<4x256xf32> to vector<4x2xf32>
    %51 = tpu.concatenate %49, %50 in 1 : vector<4x254xf32>, vector<4x2xf32> -> vector<4x256xf32>
    %cst_15 = arith.constant 0.000000e+00 : f32
    %52 = vector.shape_cast %20 : vector<1x256xi1> to vector<1x256xi1>
    %53 = vector.broadcast %52 : vector<1x256xi1> to vector<4x256xi1>
    %54 = vector.broadcast %cst_15 : f32 to vector<4x256xf32>
    %55 = arith.select %53, %51, %54 : vector<4x256xi1>, vector<4x256xf32>
    %c12 = arith.constant 12 : index
    %c0_16 = arith.constant 0 : index
    %56 = vector.load %arg8[%c12, %c0_16] : memref<36x512xf32, #tpu.memory_space<vmem>>, vector<4x256xf32>
    tpu.vector_store %arg8[%c12, %c0_16], %48 {strides = array<i32>} : memref<36x512xf32, #tpu.memory_space<vmem>>, vector<4x256xf32>,
    %c16 = arith.constant 16 : index
    %c0_17 = arith.constant 0 : index
    %57 = vector.load %arg8[%c16, %c0_17] : memref<36x512xf32, #tpu.memory_space<vmem>>, vector<4x256xf32>
    tpu.vector_store %arg8[%c16, %c0_17], %41 {strides = array<i32>} : memref<36x512xf32, #tpu.memory_space<vmem>>, vector<4x256xf32>,
    %c20 = arith.constant 20 : index
    %c0_18 = arith.constant 0 : index
    %58 = vector.load %arg8[%c20, %c0_18] : memref<36x512xf32, #tpu.memory_space<vmem>>, vector<4x256xf32>
    tpu.vector_store %arg8[%c20, %c0_18], %55 {strides = array<i32>} : memref<36x512xf32, #tpu.memory_space<vmem>>, vector<4x256xf32>,
    %c0_19 = arith.constant 0 : index
    %c0_20 = arith.constant 0 : index
    %c0_21 = arith.constant 0 : index
    %c64 = arith.constant 64 : index
    %59 = vector.load %arg2[%c0_19, %c0_20, %c0_21, %c64] : memref<2x1x4x320xf32, #tpu.memory_space<vmem>>, vector<1x1x4x256xf32>
    %60 = vector.shape_cast %59 : vector<1x1x4x256xf32> to vector<4x256xf32>
    %61 = vector.extract_strided_slice %60 {offsets = [0, 254], sizes = [4, 2], strides = [1, 1]} : vector<4x256xf32> to vector<4x2xf32>
    %62 = vector.extract_strided_slice %60 {offsets = [0, 0], sizes = [4, 254], strides = [1, 1]} : vector<4x256xf32> to vector<4x254xf32>
    %63 = tpu.concatenate %61, %62 in 1 : vector<4x2xf32>, vector<4x254xf32> -> vector<4x256xf32>
    %cst_22 = arith.constant 0.000000e+00 : f32
    %64 = vector.shape_cast %18 : vector<1x256xi1> to vector<1x256xi1>
    %65 = vector.broadcast %64 : vector<1x256xi1> to vector<4x256xi1>
    %66 = vector.broadcast %cst_22 : f32 to vector<4x256xf32>
    %67 = arith.select %65, %63, %66 : vector<4x256xi1>, vector<4x256xf32>
    %68 = vector.extract_strided_slice %60 {offsets = [0, 2], sizes = [4, 254], strides = [1, 1]} : vector<4x256xf32> to vector<4x254xf32>
    %69 = vector.extract_strided_slice %60 {offsets = [0, 0], sizes = [4, 2], strides = [1, 1]} : vector<4x256xf32> to vector<4x2xf32>
    %70 = tpu.concatenate %68, %69 in 1 : vector<4x254xf32>, vector<4x2xf32> -> vector<4x256xf32>
    %cst_23 = arith.constant 0.000000e+00 : f32
    %71 = vector.shape_cast %20 : vector<1x256xi1> to vector<1x256xi1>
    %72 = vector.broadcast %71 : vector<1x256xi1> to vector<4x256xi1>
    %73 = vector.broadcast %cst_23 : f32 to vector<4x256xf32>
    %74 = arith.select %72, %70, %73 : vector<4x256xi1>, vector<4x256xf32>
    %c24 = arith.constant 24 : index
    %c0_24 = arith.constant 0 : index
    %75 = vector.load %arg8[%c24, %c0_24] : memref<36x512xf32, #tpu.memory_space<vmem>>, vector<4x256xf32>
    tpu.vector_store %arg8[%c24, %c0_24], %67 {strides = array<i32>} : memref<36x512xf32, #tpu.memory_space<vmem>>, vector<4x256xf32>,
    %c28 = arith.constant 28 : index
    %c0_25 = arith.constant 0 : index
    %76 = vector.load %arg8[%c28, %c0_25] : memref<36x512xf32, #tpu.memory_space<vmem>>, vector<4x256xf32>
    tpu.vector_store %arg8[%c28, %c0_25], %60 {strides = array<i32>} : memref<36x512xf32, #tpu.memory_space<vmem>>, vector<4x256xf32>,
    %c32_26 = arith.constant 32 : index
    %c0_27 = arith.constant 0 : index
    %77 = vector.load %arg8[%c32_26, %c0_27] : memref<36x512xf32, #tpu.memory_space<vmem>>, vector<4x256xf32>
    tpu.vector_store %arg8[%c32_26, %c0_27], %74 {strides = array<i32>} : memref<36x512xf32, #tpu.memory_space<vmem>>, vector<4x256xf32>,
    %c1 = arith.constant 1 : index
    %c0_28 = arith.constant 0 : index
    %c0_29 = arith.constant 0 : index
    %c0_30 = arith.constant 0 : index
    %78 = vector.load %arg2[%c1, %c0_28, %c0_29, %c0_30] : memref<2x1x4x320xf32, #tpu.memory_space<vmem>>, vector<1x1x4x256xf32>
    %79 = vector.shape_cast %78 : vector<1x1x4x256xf32> to vector<4x256xf32>
    %80 = vector.extract_strided_slice %79 {offsets = [0, 254], sizes = [4, 2], strides = [1, 1]} : vector<4x256xf32> to vector<4x2xf32>
    %81 = vector.extract_strided_slice %79 {offsets = [0, 0], sizes = [4, 254], strides = [1, 1]} : vector<4x256xf32> to vector<4x254xf32>
    %82 = tpu.concatenate %80, %81 in 1 : vector<4x2xf32>, vector<4x254xf32> -> vector<4x256xf32>
    %cst_31 = arith.constant 0.000000e+00 : f32
    %83 = vector.shape_cast %18 : vector<1x256xi1> to vector<1x256xi1>
    %84 = vector.broadcast %83 : vector<1x256xi1> to vector<4x256xi1>
    %85 = vector.broadcast %cst_31 : f32 to vector<4x256xf32>
    %86 = arith.select %84, %82, %85 : vector<4x256xi1>, vector<4x256xf32>
    %87 = vector.extract_strided_slice %79 {offsets = [0, 2], sizes = [4, 254], strides = [1, 1]} : vector<4x256xf32> to vector<4x254xf32>
    %88 = vector.extract_strided_slice %79 {offsets = [0, 0], sizes = [4, 2], strides = [1, 1]} : vector<4x256xf32> to vector<4x2xf32>
    %89 = tpu.concatenate %87, %88 in 1 : vector<4x254xf32>, vector<4x2xf32> -> vector<4x256xf32>
    %cst_32 = arith.constant 0.000000e+00 : f32
    %90 = vector.shape_cast %20 : vector<1x256xi1> to vector<1x256xi1>
    %91 = vector.broadcast %90 : vector<1x256xi1> to vector<4x256xi1>
    %92 = vector.broadcast %cst_32 : f32 to vector<4x256xf32>
    %93 = arith.select %91, %89, %92 : vector<4x256xi1>, vector<4x256xf32>
    %c0_33 = arith.constant 0 : index
    %c256 = arith.constant 256 : index
    %94 = vector.load %arg8[%c0_33, %c256] : memref<36x512xf32, #tpu.memory_space<vmem>>, vector<4x256xf32>
    tpu.vector_store %arg8[%c0_33, %c256], %86 {strides = array<i32>} : memref<36x512xf32, #tpu.memory_space<vmem>>, vector<4x256xf32>,
    %c4_34 = arith.constant 4 : index
    %c256_35 = arith.constant 256 : index
    %95 = vector.load %arg8[%c4_34, %c256_35] : memref<36x512xf32, #tpu.memory_space<vmem>>, vector<4x256xf32>
    tpu.vector_store %arg8[%c4_34, %c256_35], %79 {strides = array<i32>} : memref<36x512xf32, #tpu.memory_space<vmem>>, vector<4x256xf32>,
    %c8_36 = arith.constant 8 : index
    %c256_37 = arith.constant 256 : index
    %96 = vector.load %arg8[%c8_36, %c256_37] : memref<36x512xf32, #tpu.memory_space<vmem>>, vector<4x256xf32>
    tpu.vector_store %arg8[%c8_36, %c256_37], %93 {strides = array<i32>} : memref<36x512xf32, #tpu.memory_space<vmem>>, vector<4x256xf32>,
    %c1_38 = arith.constant 1 : index
    %c0_39 = arith.constant 0 : index
    %c0_40 = arith.constant 0 : index
    %c32_41 = arith.constant 32 : index
    %97 = vector.load %arg2[%c1_38, %c0_39, %c0_40, %c32_41] : memref<2x1x4x320xf32, #tpu.memory_space<vmem>>, vector<1x1x4x256xf32>
    %98 = vector.shape_cast %97 : vector<1x1x4x256xf32> to vector<4x256xf32>
    %99 = vector.extract_strided_slice %98 {offsets = [0, 254], sizes = [4, 2], strides = [1, 1]} : vector<4x256xf32> to vector<4x2xf32>
    %100 = vector.extract_strided_slice %98 {offsets = [0, 0], sizes = [4, 254], strides = [1, 1]} : vector<4x256xf32> to vector<4x254xf32>
    %101 = tpu.concatenate %99, %100 in 1 : vector<4x2xf32>, vector<4x254xf32> -> vector<4x256xf32>
    %cst_42 = arith.constant 0.000000e+00 : f32
    %102 = vector.shape_cast %18 : vector<1x256xi1> to vector<1x256xi1>
    %103 = vector.broadcast %102 : vector<1x256xi1> to vector<4x256xi1>
    %104 = vector.broadcast %cst_42 : f32 to vector<4x256xf32>
    %105 = arith.select %103, %101, %104 : vector<4x256xi1>, vector<4x256xf32>
    %106 = vector.extract_strided_slice %98 {offsets = [0, 2], sizes = [4, 254], strides = [1, 1]} : vector<4x256xf32> to vector<4x254xf32>
    %107 = vector.extract_strided_slice %98 {offsets = [0, 0], sizes = [4, 2], strides = [1, 1]} : vector<4x256xf32> to vector<4x2xf32>
    %108 = tpu.concatenate %106, %107 in 1 : vector<4x254xf32>, vector<4x2xf32> -> vector<4x256xf32>
    %cst_43 = arith.constant 0.000000e+00 : f32
    %109 = vector.shape_cast %20 : vector<1x256xi1> to vector<1x256xi1>
    %110 = vector.broadcast %109 : vector<1x256xi1> to vector<4x256xi1>
    %111 = vector.broadcast %cst_43 : f32 to vector<4x256xf32>
    %112 = arith.select %110, %108, %111 : vector<4x256xi1>, vector<4x256xf32>
    %c12_44 = arith.constant 12 : index
    %c256_45 = arith.constant 256 : index
    %113 = vector.load %arg8[%c12_44, %c256_45] : memref<36x512xf32, #tpu.memory_space<vmem>>, vector<4x256xf32>
    tpu.vector_store %arg8[%c12_44, %c256_45], %105 {strides = array<i32>} : memref<36x512xf32, #tpu.memory_space<vmem>>, vector<4x256xf32>,
    %c16_46 = arith.constant 16 : index
    %c256_47 = arith.constant 256 : index
    %114 = vector.load %arg8[%c16_46, %c256_47] : memref<36x512xf32, #tpu.memory_space<vmem>>, vector<4x256xf32>
    tpu.vector_store %arg8[%c16_46, %c256_47], %98 {strides = array<i32>} : memref<36x512xf32, #tpu.memory_space<vmem>>, vector<4x256xf32>,
    %c20_48 = arith.constant 20 : index
    %c256_49 = arith.constant 256 : index
    %115 = vector.load %arg8[%c20_48, %c256_49] : memref<36x512xf32, #tpu.memory_space<vmem>>, vector<4x256xf32>
    tpu.vector_store %arg8[%c20_48, %c256_49], %112 {strides = array<i32>} : memref<36x512xf32, #tpu.memory_space<vmem>>, vector<4x256xf32>,
    %c1_50 = arith.constant 1 : index
    %c0_51 = arith.constant 0 : index
    %c0_52 = arith.constant 0 : index
    %c64_53 = arith.constant 64 : index
    %116 = vector.load %arg2[%c1_50, %c0_51, %c0_52, %c64_53] : memref<2x1x4x320xf32, #tpu.memory_space<vmem>>, vector<1x1x4x256xf32>
    %117 = vector.shape_cast %116 : vector<1x1x4x256xf32> to vector<4x256xf32>
    %118 = vector.extract_strided_slice %117 {offsets = [0, 254], sizes = [4, 2], strides = [1, 1]} : vector<4x256xf32> to vector<4x2xf32>
    %119 = vector.extract_strided_slice %117 {offsets = [0, 0], sizes = [4, 254], strides = [1, 1]} : vector<4x256xf32> to vector<4x254xf32>
    %120 = tpu.concatenate %118, %119 in 1 : vector<4x2xf32>, vector<4x254xf32> -> vector<4x256xf32>
    %cst_54 = arith.constant 0.000000e+00 : f32
    %121 = vector.shape_cast %18 : vector<1x256xi1> to vector<1x256xi1>
    %122 = vector.broadcast %121 : vector<1x256xi1> to vector<4x256xi1>
    %123 = vector.broadcast %cst_54 : f32 to vector<4x256xf32>
    %124 = arith.select %122, %120, %123 : vector<4x256xi1>, vector<4x256xf32>
    %125 = vector.extract_strided_slice %117 {offsets = [0, 2], sizes = [4, 254], strides = [1, 1]} : vector<4x256xf32> to vector<4x254xf32>
    %126 = vector.extract_strided_slice %117 {offsets = [0, 0], sizes = [4, 2], strides = [1, 1]} : vector<4x256xf32> to vector<4x2xf32>
    %127 = tpu.concatenate %125, %126 in 1 : vector<4x254xf32>, vector<4x2xf32> -> vector<4x256xf32>
    %cst_55 = arith.constant 0.000000e+00 : f32
    %128 = vector.shape_cast %20 : vector<1x256xi1> to vector<1x256xi1>
    %129 = vector.broadcast %128 : vector<1x256xi1> to vector<4x256xi1>
    %130 = vector.broadcast %cst_55 : f32 to vector<4x256xf32>
    %131 = arith.select %129, %127, %130 : vector<4x256xi1>, vector<4x256xf32>
    %c24_56 = arith.constant 24 : index
    %c256_57 = arith.constant 256 : index
    %132 = vector.load %arg8[%c24_56, %c256_57] : memref<36x512xf32, #tpu.memory_space<vmem>>, vector<4x256xf32>
    tpu.vector_store %arg8[%c24_56, %c256_57], %124 {strides = array<i32>} : memref<36x512xf32, #tpu.memory_space<vmem>>, vector<4x256xf32>,
    %c28_58 = arith.constant 28 : index
    %c256_59 = arith.constant 256 : index
    %133 = vector.load %arg8[%c28_58, %c256_59] : memref<36x512xf32, #tpu.memory_space<vmem>>, vector<4x256xf32>
    tpu.vector_store %arg8[%c28_58, %c256_59], %117 {strides = array<i32>} : memref<36x512xf32, #tpu.memory_space<vmem>>, vector<4x256xf32>,
    %c32_60 = arith.constant 32 : index
    %c256_61 = arith.constant 256 : index
    %134 = vector.load %arg8[%c32_60, %c256_61] : memref<36x512xf32, #tpu.memory_space<vmem>>, vector<4x256xf32>
    tpu.vector_store %arg8[%c32_60, %c256_61], %131 {strides = array<i32>} : memref<36x512xf32, #tpu.memory_space<vmem>>, vector<4x256xf32>,
    %c0_62 = arith.constant 0 : index
    %c0_63 = arith.constant 0 : index
    %135 = vector.load %arg8[%c0_62, %c0_63] : memref<36x512xf32, #tpu.memory_space<vmem>>, vector<36x512xf32>
    %c0_64 = arith.constant 0 : index
    %c0_65 = arith.constant 0 : index
    %136 = vector.load %arg3[%c0_64, %c0_65] : memref<4x36xf32, #tpu.memory_space<vmem>>, vector<4x36xf32>
    %cst_66 = arith.constant dense<0.000000e+00> : vector<4x512xf32>
    %137 = tpu.matmul %136, %135, %cst_66 {dimension_numbers = #tpu.dot_dimension_numbers<[1], [0], [0], [1], [0, 0, 1, 1], [], []>} : vector<4x36xf32>, vector<36x512xf32>, vector<4x512xf32> -> vector<4x512xf32>
    %c0_67 = arith.constant 0 : index
    %c0_68 = arith.constant 0 : index
    %138 = vector.load %arg4[%c0_67, %c0_68] : memref<4x1xf32, #tpu.memory_space<vmem>>, vector<4x1xf32>
    %139 = vector.broadcast %138 : vector<4x1xf32> to vector<4x512xf32>
    %140 = arith.addf %137, %139 : vector<4x512xf32>
    %cst_69 = arith.constant 0.000000e+00 : f32
    %141 = vector.broadcast %cst_69 : f32 to vector<4x512xf32>
    %142 = arith.maximumf %140, %141 : vector<4x512xf32>
    %c0_70 = arith.constant 0 : index
    %c0_71 = arith.constant 0 : index
    %143 = vector.load %arg5[%c0_70, %c0_71] : memref<4x4xf32, #tpu.memory_space<vmem>>, vector<4x4xf32>
    %cst_72 = arith.constant dense<0.000000e+00> : vector<4x512xf32>
    %144 = tpu.matmul %143, %142, %cst_72 {dimension_numbers = #tpu.dot_dimension_numbers<[1], [0], [0], [1], [0, 0, 1, 1], [], []>} : vector<4x4xf32>, vector<4x512xf32>, vector<4x512xf32> -> vector<4x512xf32>
    %c0_73 = arith.constant 0 : index
    %c0_74 = arith.constant 0 : index
    %145 = vector.load %arg6[%c0_73, %c0_74] : memref<4x1xf32, #tpu.memory_space<vmem>>, vector<4x1xf32>
    %146 = vector.broadcast %145 : vector<4x1xf32> to vector<4x512xf32>
    %147 = arith.addf %144, %146 : vector<4x512xf32>
    %c0_75 = arith.constant 0 : index
    %c0_76 = arith.constant 0 : index
    %c0_77 = arith.constant 0 : index
    %c32_78 = arith.constant 32 : index
    %148 = vector.load %arg2[%c0_75, %c0_76, %c0_77, %c32_78] : memref<2x1x4x320xf32, #tpu.memory_space<vmem>>, vector<1x1x4x256xf32>
    %149 = vector.shape_cast %148 : vector<1x1x4x256xf32> to vector<4x256xf32>
    %150 = vector.extract_strided_slice %147 {offsets = [0, 0], sizes = [4, 256], strides = [1, 1]} : vector<4x512xf32> to vector<4x256xf32>
    %151 = arith.addf %150, %149 : vector<4x256xf32>
    %c0_79 = arith.constant 0 : index
    %c0_80 = arith.constant 0 : index
    %c0_81 = arith.constant 0 : index
    %152 = vector.load %arg7[%c0_79, %c0_80, %c0_81] : memref<2x4x256xf32, #tpu.memory_space<vmem>>, vector<1x4x256xf32>
    %153 = vector.shape_cast %152 : vector<1x4x256xf32> to vector<4x256xf32>
    %154 = vector.shape_cast %151 : vector<4x256xf32> to vector<1x4x256xf32>
    tpu.vector_store %arg7[%c0_79, %c0_80, %c0_81], %154 {strides = array<i32>} : memref<2x4x256xf32, #tpu.memory_space<vmem>>, vector<1x4x256xf32>,
    %c1_82 = arith.constant 1 : index
    %c0_83 = arith.constant 0 : index
    %c0_84 = arith.constant 0 : index
    %c32_85 = arith.constant 32 : index
    %155 = vector.load %arg2[%c1_82, %c0_83, %c0_84, %c32_85] : memref<2x1x4x320xf32, #tpu.memory_space<vmem>>, vector<1x1x4x256xf32>
    %156 = vector.shape_cast %155 : vector<1x1x4x256xf32> to vector<4x256xf32>
    %157 = vector.extract_strided_slice %147 {offsets = [0, 256], sizes = [4, 256], strides = [1, 1]} : vector<4x512xf32> to vector<4x256xf32>
    %158 = arith.addf %157, %156 : vector<4x256xf32>
    %c1_86 = arith.constant 1 : index
    %c0_87 = arith.constant 0 : index
    %c0_88 = arith.constant 0 : index
    %159 = vector.load %arg7[%c1_86, %c0_87, %c0_88] : memref<2x4x256xf32, #tpu.memory_space<vmem>>, vector<1x4x256xf32>
    %160 = vector.shape_cast %159 : vector<1x4x256xf32> to vector<4x256xf32>
    %161 = vector.shape_cast %158 : vector<4x256xf32> to vector<1x4x256xf32>
    tpu.vector_store %arg7[%c1_86, %c0_87, %c0_88], %161 {strides = array<i32>} : memref<2x4x256xf32, #tpu.memory_space<vmem>>, vector<1x4x256xf32>,
    return
  }
  func.func @transform_0(%arg0: i32, %arg1: i32) -> (i32, i32, i32, i32) {
    %c0_i32 = arith.constant 0 : i32
    %c0_i32_0 = arith.constant 0 : i32
    %c0_i32_1 = arith.constant 0 : i32
    return %arg0, %arg1, %c0_i32, %c0_i32_0 : i32, i32, i32, i32
  }
  func.func @transform_1(%arg0: i32, %arg1: i32) -> (i32, i32) {
    %c0_i32 = arith.constant 0 : i32
    %c0_i32_0 = arith.constant 0 : i32
    %c0_i32_1 = arith.constant 0 : i32
    return %c0_i32, %c0_i32_0 : i32, i32
  }
  func.func @transform_2(%arg0: i32, %arg1: i32) -> (i32, i32) {
    %c0_i32 = arith.constant 0 : i32
    %c0_i32_0 = arith.constant 0 : i32
    %c0_i32_1 = arith.constant 0 : i32
    return %c0_i32, %c0_i32_0 : i32, i32
  }
  func.func @transform_3(%arg0: i32, %arg1: i32) -> (i32, i32) {
    %c0_i32 = arith.constant 0 : i32
    %c0_i32_0 = arith.constant 0 : i32
    %c0_i32_1 = arith.constant 0 : i32
    return %c0_i32, %c0_i32_0 : i32, i32
  }
  func.func @transform_4(%arg0: i32, %arg1: i32) -> (i32, i32) {
    %c0_i32 = arith.constant 0 : i32
    %c0_i32_0 = arith.constant 0 : i32
    %c0_i32_1 = arith.constant 0 : i32
    return %c0_i32, %c0_i32_0 : i32, i32
  }
  func.func @transform_5(%arg0: i32, %arg1: i32) -> (i32, i32, i32) {
    %c0_i32 = arith.constant 0 : i32
    %c0_i32_0 = arith.constant 0 : i32
    return %arg0, %c0_i32, %arg1 : i32, i32, i32
  }
}

</mosaic_0001>

<llo_original>
// kernel: tpu_custom_call.1
$region0: #{tpu_custom_call.1}
  #allocation0 [shape = 'u32[]', space=smem, size = 0x4, offset = 0x4, fixed_abs, tag = 'smem constant byte address 0x4 - core index']
  #allocation1 [shape = 'u32[144,128]{1,0:T(1,128)}', space=vmem, size = 0x12000, scoped, tag = 'internal scratch']
  #allocation2 [shape = 'f32[36,512]{1,0:T(8,128)}', space=vmem, size = 0x14000, scoped, tag = 'scratch operand']
  %s0 = inlined_call_operand.hbm [shape: f32[2,1,4,320], index: 0, kind: input, shape index: {}]
  %s1 = inlined_call_operand.vmem [shape: f32[4,36], index: 1, kind: input, shape index: {}]
  %s2 = inlined_call_operand.vmem [shape: f32[4,1], index: 2, kind: input, shape index: {}]
  %s3 = inlined_call_operand.vmem [shape: f32[4,4], index: 3, kind: input, shape index: {}]
  %s4 = inlined_call_operand.vmem [shape: f32[4,1], index: 4, kind: input, shape index: {}]
  %s5 = inlined_call_operand.hbm [shape: f32[2,4,256], index: 5, kind: output, shape index: {}]
  %s6 = sld [smem:[#allocation0]]
  $region34: #{tpu_custom_call.1} parent=0
    _
  %s8 = ssub.s32 1, %s6
  %s9 = scalar_select 0, %s8, %s6
  $region1: #{tpu_custom_call.1} parent=0
    #allocation3 [shape = 'u8[12288]{0}', space=vmem, size = 0x3000, scoped, tag = 'input window, operand 0, single buffered']
    #allocation4 [shape = 's32[1]{0}', space=sflag, size = 0x4, scoped, tag = 'scoped memory for tpu_custom_call.1']
    #allocation5 [shape = 's32[1]{0}', space=sflag, size = 0x4, scoped, tag = 'scoped memory for tpu_custom_call.1']
    #allocation6 [shape = 'u8[8192]{0}', space=vmem, size = 0x2000, scoped, tag = 'output window, operand 0, single buffered']
    %10 = vsyncpa [#allocation4], 0
    %11 = vsyncpa [#allocation5], 0
    // Predicated region
    $region2: #{tpu_custom_call.1} parent=1 // pred_check
      _
    $region3: #{tpu_custom_call.1} parent=1 // pred_check_branch
      %13 = sbr.rel (0) target = $region5
    $region4: #{tpu_custom_call.1} parent=1 // pred_region
      %s15 = ssub.s32 384, 384
      %16 = vsyncadd [#allocation4], %s15
      %s17 = sshll.u32 [#allocation3], 4
      %s18 = int_to_ptr.vmem [resolvable:$true] %s17
      %23 = dma.hbm_to_vmem [thread:$0]  %s0, 384, %s18, [#allocation4], 192, 192, 12
    $region5: #{tpu_custom_call.1} parent=1 // pred_fallthru
      _
    // Predicated region
    $region6: #{tpu_custom_call.1} parent=1 // pred_check
      _
    $region7: #{tpu_custom_call.1} parent=1 // pred_check_branch
      %25 = sbr.rel (0) target = $region9
    $region8: #{tpu_custom_call.1} parent=1 // pred_region
      _
    $region9: #{tpu_custom_call.1} parent=1 // pred_fallthru
      _
    // Predicated region
    $region10: #{tpu_custom_call.1} parent=1 // pred_check
      _
    $region11: #{tpu_custom_call.1} parent=1 // pred_check_branch
      %27 = sbr.rel (0) target = $region13
    $region12: #{tpu_custom_call.1} parent=1 // pred_region
      _
    $region13: #{tpu_custom_call.1} parent=1 // pred_fallthru
      _
    // Predicated region
    $region14: #{tpu_custom_call.1} parent=1 // pred_check
      _
    $region15: #{tpu_custom_call.1} parent=1 // pred_check_branch
      %29 = sbr.rel (0) target = $region17
    $region16: #{tpu_custom_call.1} parent=1 // pred_region
      _
    $region17: #{tpu_custom_call.1} parent=1 // pred_fallthru
      _
    // Predicated region
    $region18: #{tpu_custom_call.1} parent=1 // pred_check
      _
    $region19: #{tpu_custom_call.1} parent=1 // pred_check_branch
      %31 = sbr.rel (0) target = $region21
    $region20: #{tpu_custom_call.1} parent=1 // pred_region
      _
    $region21: #{tpu_custom_call.1} parent=1 // pred_fallthru
      _
    // Predicated region
    $region22: #{tpu_custom_call.1} parent=1 // pred_check
      _
    $region23: #{tpu_custom_call.1} parent=1 // pred_check_branch
      %33 = sbr.rel (0) target = $region25
    $region24: #{tpu_custom_call.1} parent=1 // pred_region
      %34 = dma.done [#allocation4], 384
    $region25: #{tpu_custom_call.1} parent=1 // pred_fallthru
      _
    %v35 = vlaneseq
    %v36 = vand.u32 %v35, 127
    %v37 = vadd.s32 %v36, 128
    %vm38 = vcmp.lt.s32.totalorder %v36, 0
    %v39 = vsub.s32 0, %v36
    %v40 = vsel %vm38, %v39, %v36
    %v41 = vshrl.u32 %v40, 4
    %v42 = vand.u32 %v40, 15
    %v43 = vsub.s32 0, %v42
    %v44 = vsel %vm38, %v43, %v42
    %vm45 = vcmp.lt.s32.totalorder %v37, 0
    %v46 = vsub.s32 0, %v37
    %v47 = vsel %vm45, %v46, %v37
    %v48 = vshrl.u32 %v47, 4
    %v49 = vand.u32 %v47, 15
    %v50 = vsub.s32 0, %v49
    %v51 = vsel %vm45, %v50, %v49
    %vm52 = vcmp.ne.s32.totalorder %v44, 0
    %vm53 = vcmp.ne.s32.totalorder %v51, 0
    %vm54 = vcmp.lt.s32.totalorder %v44, 0
    %vm55 = vcmp.lt.s32.totalorder %v51, 0
    %vm56 = vmand %vm54, %vm52
    %vm57 = vmand %vm55, %vm53
    %v58 = vadd.s32 %v44, 16
    %v59 = vadd.s32 %v51, 16
    %v60 = vsel %vm56, %v58, %v44
    %v61 = vsel %vm57, %v59, %v51
    %vm62 = vcmp.ge.s32.totalorder %v60, 2
    %vm63 = vcmp.ge.s32.totalorder %v61, 2
    %vm64 = vcmp.lt.s32.totalorder %v60, 14
    %vm65 = vcmp.lt.s32.totalorder %v61, 14
    %v66 = vld [vmem:[#allocation3] sm:$0xff]
    %v68 = vcombine.high %v66, %v66
    %69 = vrot.lane.b32.xlu0 %v68, 2
    %v70 = vpop.permute.xlu0 %69
    %72 = vrot.lane.b32.xlu0 %v66, 2
    %v73 = vpop.permute.xlu0 %72
    %vm74 = vcmask 15360
    %v75 = vsel %vm74, %v73, %v70
    %v78 = vsel %vm74, %v70, %v73
    %v79 = vsel %vm62, 1, 0
    %v80 = vsel %vm63, 1, 0
    %vm81 = vcmp.eq.s32.totalorder %v79, 1
    %vm82 = vcmp.eq.s32.totalorder %v80, 1
    %v83 = vsel %vm81, %v78, 0.0
    %v84 = vsel %vm82, %v75, 0.0
    %85 = vrot.lane.b32.xlu0 %v66, 126
    %v86 = vpop.permute.xlu0 %85
    %87 = vrot.lane.b32.xlu0 %v68, 126
    %v88 = vpop.permute.xlu0 %87
    %vm89 = vcmask 1031168
    %v90 = vsel %vm89, %v86, %v88
    %v94 = vsel %vm89, %v88, %v86
    %v95 = vsel %vm64, 1, 0
    %v96 = vsel %vm65, 1, 0
    %vm97 = vcmp.eq.s32.totalorder %v95, 1
    %vm98 = vcmp.eq.s32.totalorder %v96, 1
    %v99 = vsel %vm97, %v90, 0.0
    %v100 = vsel %vm98, %v94, 0.0
    %101 = vst [vmem:[#allocation2] sm:$0xf] %v83
    %102 = vst [vmem:[#allocation2 + $0x8] sm:$0xf] %v84
    %v103 = vcombine.low %v66, %v66
    %105 = vst [vmem:[#allocation2] sm:$0xf0] %v103
    %106 = vst [vmem:[#allocation2 + $0x8] sm:$0xf0] %v66
    %107 = vst [vmem:[#allocation2 + $0x20] sm:$0xf] %v99
    %108 = vst [vmem:[#allocation2 + $0x28] sm:$0xf] %v100
    %v109 = vld [vmem:[#allocation3] sm:$0xff]
    %v110 = vld [vmem:[#allocation3 + $0x8] sm:$0xf]
    %112 = vrot.lane.b32.xlu0 %v110, 98
    %v113 = vpop.permute.xlu0 %112
    %v116 = vcombine.high %v109, %v109
    %117 = vrot.lane.b32.xlu0 %v109, 98
    %v118 = vpop.permute.xlu0 %117
    %119 = vrot.lane.b32.xlu0 %v116, 98
    %v120 = vpop.permute.xlu0 %119
    %vm121 = vcmask 801792
    %v122 = vsel %vm121, %v118, %v120
    %v123 = vsel %vm121, %v120, %v113
    %v126 = vsel %vm74, %v113, %v122
    %v127 = vsel %vm81, %v126, 0.0
    %v128 = vsel %vm82, %v123, 0.0
    %129 = vrot.lane.b32.xlu0 %v109, 94
    %v130 = vpop.permute.xlu0 %129
    %131 = vrot.lane.b32.xlu0 %v116, 94
    %v132 = vpop.permute.xlu0 %131
    %133 = vrot.lane.b32.xlu0 %v110, 94
    %v134 = vpop.permute.xlu0 %133
    %vm135 = vcmask 769024
    %v136 = vsel %vm135, %v130, %v132
    %v137 = vsel %vm135, %v132, %v134
    %v141 = vsel %vm89, %v137, %v130
    %v142 = vsel %vm97, %v136, 0.0
    %v143 = vsel %vm98, %v141, 0.0
    %v146 = vrot.slane %v127, 4
    %v147 = vrot.slane %v128, 4
    %150 = vst [vmem:[#allocation2 + $0x20] sm:$0xf0] %v146
    %151 = vst [vmem:[#allocation2 + $0x28] sm:$0xf0] %v147
    %152 = vrot.lane.b32.xlu0 %v109, 96
    %v153 = vpop.permute.xlu0 %152
    %154 = vrot.lane.b32.xlu0 %v116, 96
    %v155 = vpop.permute.xlu0 %154
    %156 = vrot.lane.b32.xlu0 %v110, 96
    %v157 = vpop.permute.xlu0 %156
    %vm158 = vcmask 785408
    %v159 = vsel %vm158, %v153, %v155
    %v160 = vsel %vm158, %v155, %v157
    %163 = vst [vmem:[#allocation2 + $0x40] sm:$0xf] %v159
    %164 = vst [vmem:[#allocation2 + $0x48] sm:$0xf] %v160
    %v167 = vrot.slane %v142, 4
    %v168 = vrot.slane %v143, 4
    %171 = vst [vmem:[#allocation2 + $0x40] sm:$0xf0] %v167
    %172 = vst [vmem:[#allocation2 + $0x48] sm:$0xf0] %v168
    %v173 = vld [vmem:[#allocation3] sm:$0xff]
    %v174 = vld [vmem:[#allocation3 + $0x8] sm:$0xf]
    %176 = vrot.lane.b32.xlu0 %v174, 66
    %v177 = vpop.permute.xlu0 %176
    %v180 = vcombine.high %v173, %v173
    %181 = vrot.lane.b32.xlu0 %v173, 66
    %v182 = vpop.permute.xlu0 %181
    %183 = vrot.lane.b32.xlu0 %v180, 66
    %v184 = vpop.permute.xlu0 %183
    %vm185 = vcmask 539648
    %v186 = vsel %vm185, %v182, %v184
    %v187 = vsel %vm185, %v184, %v177
    %v190 = vsel %vm74, %v177, %v186
    %v191 = vsel %vm81, %v190, 0.0
    %v192 = vsel %vm82, %v187, 0.0
    %193 = vrot.lane.b32.xlu0 %v173, 62
    %v194 = vpop.permute.xlu0 %193
    %195 = vrot.lane.b32.xlu0 %v180, 62
    %v196 = vpop.permute.xlu0 %195
    %197 = vrot.lane.b32.xlu0 %v174, 62
    %v198 = vpop.permute.xlu0 %197
    %vm199 = vcmask 506880
    %v200 = vsel %vm199, %v194, %v196
    %v201 = vsel %vm199, %v196, %v198
    %v205 = vsel %vm89, %v201, %v194
    %v206 = vsel %vm97, %v200, 0.0
    %v207 = vsel %vm98, %v205, 0.0
    %208 = vst [vmem:[#allocation2 + $0x60] sm:$0xf] %v191
    %209 = vst [vmem:[#allocation2 + $0x68] sm:$0xf] %v192
    %v210 = vcombine.low %v173, %v173
    %v211 = vcombine.low %v174, %v174
    %212 = vrot.lane.b32.xlu0 %v210, 64
    %v213 = vpop.permute.xlu0 %212
    %214 = vrot.lane.b32.xlu0 %v173, 64
    %v215 = vpop.permute.xlu0 %214
    %216 = vrot.lane.b32.xlu0 %v211, 64
    %v217 = vpop.permute.xlu0 %216
    %vm218 = vcmask 523264
    %v219 = vsel %vm218, %v213, %v215
    %v220 = vsel %vm218, %v215, %v217
    %223 = vst [vmem:[#allocation2 + $0x60] sm:$0xf0] %v219
    %224 = vst [vmem:[#allocation2 + $0x68] sm:$0xf0] %v220
    %225 = vst [vmem:[#allocation2 + $0x80] sm:$0xf] %v206
    %226 = vst [vmem:[#allocation2 + $0x88] sm:$0xf] %v207
    %s227 = scalar_lea.vmem [#allocation3], 12
    %v228 = vld [vmem:[%s227] sm:$0xff]
    %v230 = vcombine.high %v228, %v228
    %231 = vrot.lane.b32.xlu0 %v230, 2
    %v232 = vpop.permute.xlu0 %231
    %234 = vrot.lane.b32.xlu0 %v228, 2
    %v235 = vpop.permute.xlu0 %234
    %v236 = vsel %vm74, %v235, %v232
    %v239 = vsel %vm74, %v232, %v235
    %v240 = vsel %vm81, %v239, 0.0
    %v241 = vsel %vm82, %v236, 0.0
    %242 = vrot.lane.b32.xlu0 %v228, 126
    %v243 = vpop.permute.xlu0 %242
    %244 = vrot.lane.b32.xlu0 %v230, 126
    %v245 = vpop.permute.xlu0 %244
    %v246 = vsel %vm89, %v243, %v245
    %v250 = vsel %vm89, %v245, %v243
    %v251 = vsel %vm97, %v246, 0.0
    %v252 = vsel %vm98, %v250, 0.0
    %253 = vst [vmem:[#allocation2 + $0x10] sm:$0xf] %v240
    %254 = vst [vmem:[#allocation2 + $0x18] sm:$0xf] %v241
    %v255 = vcombine.low %v228, %v228
    %257 = vst [vmem:[#allocation2 + $0x10] sm:$0xf0] %v255
    %258 = vst [vmem:[#allocation2 + $0x18] sm:$0xf0] %v228
    %259 = vst [vmem:[#allocation2 + $0x30] sm:$0xf] %v251
    %260 = vst [vmem:[#allocation2 + $0x38] sm:$0xf] %v252
    %v261 = vld [vmem:[%s227] sm:$0xff]
    %v262 = vld [vmem:[%s227 + $0x8] sm:$0xf]
    %264 = vrot.lane.b32.xlu0 %v262, 98
    %v265 = vpop.permute.xlu0 %264
    %v268 = vcombine.high %v261, %v261
    %269 = vrot.lane.b32.xlu0 %v261, 98
    %v270 = vpop.permute.xlu0 %269
    %271 = vrot.lane.b32.xlu0 %v268, 98
    %v272 = vpop.permute.xlu0 %271
    %v273 = vsel %vm121, %v270, %v272
    %v274 = vsel %vm121, %v272, %v265
    %v277 = vsel %vm74, %v265, %v273
    %v278 = vsel %vm81, %v277, 0.0
    %v279 = vsel %vm82, %v274, 0.0
    %280 = vrot.lane.b32.xlu0 %v261, 94
    %v281 = vpop.permute.xlu0 %280
    %282 = vrot.lane.b32.xlu0 %v268, 94
    %v283 = vpop.permute.xlu0 %282
    %284 = vrot.lane.b32.xlu0 %v262, 94
    %v285 = vpop.permute.xlu0 %284
    %v286 = vsel %vm135, %v281, %v283
    %v287 = vsel %vm135, %v283, %v285
    %v291 = vsel %vm89, %v287, %v281
    %v292 = vsel %vm97, %v286, 0.0
    %v293 = vsel %vm98, %v291, 0.0
    %v296 = vrot.slane %v278, 4
    %v297 = vrot.slane %v279, 4
    %300 = vst [vmem:[#allocation2 + $0x30] sm:$0xf0] %v296
    %301 = vst [vmem:[#allocation2 + $0x38] sm:$0xf0] %v297
    %302 = vrot.lane.b32.xlu0 %v261, 96
    %v303 = vpop.permute.xlu0 %302
    %304 = vrot.lane.b32.xlu0 %v268, 96
    %v305 = vpop.permute.xlu0 %304
    %306 = vrot.lane.b32.xlu0 %v262, 96
    %v307 = vpop.permute.xlu0 %306
    %v308 = vsel %vm158, %v303, %v305
    %v309 = vsel %vm158, %v305, %v307
    %312 = vst [vmem:[#allocation2 + $0x50] sm:$0xf] %v308
    %313 = vst [vmem:[#allocation2 + $0x58] sm:$0xf] %v309
    %v316 = vrot.slane %v292, 4
    %v317 = vrot.slane %v293, 4
    %320 = vst [vmem:[#allocation2 + $0x50] sm:$0xf0] %v316
    %321 = vst [vmem:[#allocation2 + $0x58] sm:$0xf0] %v317
    %v322 = vld [vmem:[%s227] sm:$0xff]
    %v323 = vld [vmem:[%s227 + $0x8] sm:$0xf]
    %325 = vrot.lane.b32.xlu0 %v323, 66
    %v326 = vpop.permute.xlu0 %325
    %v329 = vcombine.high %v322, %v322
    %330 = vrot.lane.b32.xlu0 %v322, 66
    %v331 = vpop.permute.xlu0 %330
    %332 = vrot.lane.b32.xlu0 %v329, 66
    %v333 = vpop.permute.xlu0 %332
    %v334 = vsel %vm185, %v331, %v333
    %v335 = vsel %vm185, %v333, %v326
    %v338 = vsel %vm74, %v326, %v334
    %v339 = vsel %vm81, %v338, 0.0
    %v340 = vsel %vm82, %v335, 0.0
    %341 = vrot.lane.b32.xlu0 %v322, 62
    %v342 = vpop.permute.xlu0 %341
    %343 = vrot.lane.b32.xlu0 %v329, 62
    %v344 = vpop.permute.xlu0 %343
    %345 = vrot.lane.b32.xlu0 %v323, 62
    %v346 = vpop.permute.xlu0 %345
    %v347 = vsel %vm199, %v342, %v344
    %v348 = vsel %vm199, %v344, %v346
    %v352 = vsel %vm89, %v348, %v342
    %v353 = vsel %vm97, %v347, 0.0
    %v354 = vsel %vm98, %v352, 0.0
    %355 = vst [vmem:[#allocation2 + $0x70] sm:$0xf] %v339
    %356 = vst [vmem:[#allocation2 + $0x78] sm:$0xf] %v340
    %v357 = vcombine.low %v322, %v322
    %v358 = vcombine.low %v323, %v323
    %359 = vrot.lane.b32.xlu0 %v357, 64
    %v360 = vpop.permute.xlu0 %359
    %361 = vrot.lane.b32.xlu0 %v322, 64
    %v362 = vpop.permute.xlu0 %361
    %363 = vrot.lane.b32.xlu0 %v358, 64
    %v364 = vpop.permute.xlu0 %363
    %v365 = vsel %vm218, %v360, %v362
    %v366 = vsel %vm218, %v362, %v364
    %369 = vst [vmem:[#allocation2 + $0x70] sm:$0xf0] %v365
    %370 = vst [vmem:[#allocation2 + $0x78] sm:$0xf0] %v366
    %371 = vst [vmem:[#allocation2 + $0x90] sm:$0xf] %v353
    %372 = vst [vmem:[#allocation2 + $0x98] sm:$0xf] %v354
    %v373 = vld [vmem:[#allocation2] sm:$0xff]
    %v374 = vld [vmem:[#allocation2 + $0x8] sm:$0xff]
    %v375 = vld [vmem:[#allocation2 + $0x10] sm:$0xff]
    %v376 = vld [vmem:[#allocation2 + $0x18] sm:$0xff]
    %v377 = vld [vmem:[#allocation2 + $0x20] sm:$0xff]
    %v378 = vld [vmem:[#allocation2 + $0x28] sm:$0xff]
    %v379 = vld [vmem:[#allocation2 + $0x30] sm:$0xff]
    %v380 = vld [vmem:[#allocation2 + $0x38] sm:$0xff]
    %v381 = vld [vmem:[#allocation2 + $0x40] sm:$0xff]
    %v382 = vld [vmem:[#allocation2 + $0x48] sm:$0xff]
    %v383 = vld [vmem:[#allocation2 + $0x50] sm:$0xff]
    %v384 = vld [vmem:[#allocation2 + $0x58] sm:$0xff]
    %v385 = vld [vmem:[#allocation2 + $0x60] sm:$0xff]
    %v386 = vld [vmem:[#allocation2 + $0x68] sm:$0xff]
    %v387 = vld [vmem:[#allocation2 + $0x70] sm:$0xff]
    %v388 = vld [vmem:[#allocation2 + $0x78] sm:$0xff]
    %v389 = vld [vmem:[#allocation2 + $0x80] sm:$0xf]
    %v390 = vld [vmem:[#allocation2 + $0x88] sm:$0xf]
    %v391 = vld [vmem:[#allocation2 + $0x90] sm:$0xf]
    %v392 = vld [vmem:[#allocation2 + $0x98] sm:$0xf]
    %v393 = vld [vmem:[%s1] sm:$0xf]
    %v394 = vld [vmem:[%s2] sm:$0xf]
    %396 = vset.pattern.permute.xlu0 0
    %397 = vperm.xlu0 %396, %v394
    %v398 = vpop.permute.xlu0 %397
    %vm400 = vcmask 293888
    %v402 = vsel %vm400, %v393, 0
    %vm404 = vcmask 1043456
    %v406 = vsel %vm404, %v389, 0
    %v409 = vsel %vm404, %v390, 0
    %v412 = vsel %vm404, %v391, 0
    %v415 = vsel %vm404, %v392, 0
    %417 = vmatprep.subr.mxu0 0.0
    %418 = vmatpush1.msra.mxu0 0.0
    %419 = vmatprep.subr.mxu0 0.0
    %420 = vmatpush1.msra.mxu0 0.0
    %421 = vmatprep.subr.mxu0 0.0
    %422 = vmatpush1.msra.mxu0 0.0
    %423 = vmatprep.subr.mxu0 0.0
    %424 = vmatpush1.msra.mxu0 0.0
    %425 = vmatprep.subr.mxu0 0.0
    %426 = vmatpush1.msra.mxu0 0.0
    %427 = vmatprep.subr.mxu0 0.0
    %428 = vmatpush1.msra.mxu0 0.0
    %429 = vmatprep.subr.mxu0 0.0
    %430 = vmatpush1.msra.mxu0 0.0
    %431 = vmatprep.subr.mxu0 0.0
    %432 = vmatpush1.msra.mxu0 0.0
    %433 = vmatprep.subr.mxu0 0.0
    %434 = vmatpush1.msra.mxu0 0.0
    %435 = vmatprep.subr.mxu0 0.0
    %436 = vmatpush1.msra.mxu0 0.0
    %437 = vmatprep.subr.mxu0 0.0
    %438 = vmatpush1.msra.mxu0 0.0
    %439 = vmatprep.subr.mxu0 %v409
    %440 = vmatpush1.msra.mxu0 %v406
    %441 = vmatprep.subr.mxu0 %v386
    %442 = vmatpush1.msra.mxu0 %v385
    %443 = vmatprep.subr.mxu0 %v382
    %444 = vmatpush1.msra.mxu0 %v381
    %445 = vmatprep.subr.mxu0 %v378
    %446 = vmatpush1.msra.mxu0 %v377
    %447 = vmatprep.subr.mxu0 %v374
    %448 = vmatpush1.msra.mxu0 %v373
    %449 = vmatprep.subr.mxu0 0.0
    %450 = vmatpush2.msra.mxu0 0.0
    %451 = vmatprep.subr.mxu0 0.0
    %452 = vmatpush2.msra.mxu0 0.0
    %453 = vmatprep.subr.mxu0 0.0
    %454 = vmatpush2.msra.mxu0 0.0
    %455 = vmatprep.subr.mxu0 0.0
    %456 = vmatpush2.msra.mxu0 0.0
    %457 = vmatprep.subr.mxu0 0.0
    %458 = vmatpush2.msra.mxu0 0.0
    %459 = vmatprep.subr.mxu0 0.0
    %460 = vmatpush2.msra.mxu0 0.0
    %461 = vmatprep.subr.mxu0 0.0
    %462 = vmatpush2.msra.mxu0 0.0
    %463 = vmatprep.subr.mxu0 0.0
    %464 = vmatpush2.msra.mxu0 0.0
    %465 = vmatprep.subr.mxu0 0.0
    %466 = vmatpush2.msra.mxu0 0.0
    %467 = vmatprep.subr.mxu0 0.0
    %468 = vmatpush2.msra.mxu0 0.0
    %469 = vmatprep.subr.mxu0 0.0
    %470 = vmatpush2.msra.mxu0 0.0
    %471 = vmatprep.subr.mxu0 0.0
    %472 = vmatpush2.msra.mxu0 0.0
    %473 = vmatprep.subr.mxu0 0.0
    %474 = vmatpush2.msra.mxu0 0.0
    %475 = vmatprep.subr.mxu0 0.0
    %476 = vmatpush2.msra.mxu0 0.0
    %477 = vmatprep.subr.mxu0 0.0
    %478 = vmatpush2.msra.mxu0 0.0
    %479 = vmatprep.subr.mxu0 0.0
    %480 = vmatpush2.msra.mxu0 0.0
    %481 = vmatprep.mubr.f32.mxu0 0.0
    %482 = vmatmul.mubr.f32.gmra.mxu0 %v402
    %v483 = vpop.f32.mrf.mxu0
    %v484 = vadd.f32 %v398, %v483
    %v485 = vpop.f32.mrf.mxu0
    %v486 = vadd.f32 %v398, %v485
    %487 = vdwg.mxu0
    %488 = vmatprep.subr.mxu0 0.0
    %489 = vmatpush1.msra.mxu0 0.0
    %490 = vmatprep.subr.mxu0 0.0
    %491 = vmatpush1.msra.mxu0 0.0
    %492 = vmatprep.subr.mxu0 0.0
    %493 = vmatpush1.msra.mxu0 0.0
    %494 = vmatprep.subr.mxu0 0.0
    %495 = vmatpush1.msra.mxu0 0.0
    %496 = vmatprep.subr.mxu0 0.0
    %497 = vmatpush1.msra.mxu0 0.0
    %498 = vmatprep.subr.mxu0 0.0
    %499 = vmatpush1.msra.mxu0 0.0
    %500 = vmatprep.subr.mxu0 0.0
    %501 = vmatpush1.msra.mxu0 0.0
    %502 = vmatprep.subr.mxu0 0.0
    %503 = vmatpush1.msra.mxu0 0.0
    %504 = vmatprep.subr.mxu0 0.0
    %505 = vmatpush1.msra.mxu0 0.0
    %506 = vmatprep.subr.mxu0 0.0
    %507 = vmatpush1.msra.mxu0 0.0
    %508 = vmatprep.subr.mxu0 0.0
    %509 = vmatpush1.msra.mxu0 0.0
    %510 = vmatprep.subr.mxu0 %v415
    %511 = vmatpush1.msra.mxu0 %v412
    %512 = vmatprep.subr.mxu0 %v388
    %513 = vmatpush1.msra.mxu0 %v387
    %514 = vmatprep.subr.mxu0 %v384
    %515 = vmatpush1.msra.mxu0 %v383
    %516 = vmatprep.subr.mxu0 %v380
    %517 = vmatpush1.msra.mxu0 %v379
    %518 = vmatprep.subr.mxu0 %v376
    %519 = vmatpush1.msra.mxu0 %v375
    %520 = vmatprep.subr.mxu0 0.0
    %521 = vmatpush2.msra.mxu0 0.0
    %522 = vmatprep.subr.mxu0 0.0
    %523 = vmatpush2.msra.mxu0 0.0
    %524 = vmatprep.subr.mxu0 0.0
    %525 = vmatpush2.msra.mxu0 0.0
    %526 = vmatprep.subr.mxu0 0.0
    %527 = vmatpush2.msra.mxu0 0.0
    %528 = vmatprep.subr.mxu0 0.0
    %529 = vmatpush2.msra.mxu0 0.0
    %530 = vmatprep.subr.mxu0 0.0
    %531 = vmatpush2.msra.mxu0 0.0
    %532 = vmatprep.subr.mxu0 0.0
    %533 = vmatpush2.msra.mxu0 0.0
    %534 = vmatprep.subr.mxu0 0.0
    %535 = vmatpush2.msra.mxu0 0.0
    %536 = vmatprep.subr.mxu0 0.0
    %537 = vmatpush2.msra.mxu0 0.0
    %538 = vmatprep.subr.mxu0 0.0
    %539 = vmatpush2.msra.mxu0 0.0
    %540 = vmatprep.subr.mxu0 0.0
    %541 = vmatpush2.msra.mxu0 0.0
    %542 = vmatprep.subr.mxu0 0.0
    %543 = vmatpush2.msra.mxu0 0.0
    %544 = vmatprep.subr.mxu0 0.0
    %545 = vmatpush2.msra.mxu0 0.0
    %546 = vmatprep.subr.mxu0 0.0
    %547 = vmatpush2.msra.mxu0 0.0
    %548 = vmatprep.subr.mxu0 0.0
    %549 = vmatpush2.msra.mxu0 0.0
    %550 = vmatprep.subr.mxu0 0.0
    %551 = vmatpush2.msra.mxu0 0.0
    %552 = vmatprep.mubr.f32.mxu0 0.0
    %553 = vmatmul.mubr.f32.gmra.mxu0 %v402
    %v554 = vpop.f32.mrf.mxu0
    %v555 = vadd.f32 %v398, %v554
    %v556 = vpop.f32.mrf.mxu0
    %v557 = vadd.f32 %v398, %v556
    %558 = vdwg.mxu0
    %v559 = vmax.f32 %v484, 0.0
    %v560 = vmax.f32 %v486, 0.0
    %v561 = vmax.f32 %v555, 0.0
    %v562 = vmax.f32 %v557, 0.0
    %v563 = vld [vmem:[%s3] sm:$0xf]
    %v564 = vld [vmem:[%s4] sm:$0xf]
    %566 = vset.pattern.permute.xlu0 0
    %567 = vperm.xlu0 %566, %v564
    %v568 = vpop.permute.xlu0 %567
    %vm570 = vcmask 31744
    %v572 = vsel %vm570, %v563, 0
    %v575 = vsel %vm404, %v559, 0
    %v578 = vsel %vm404, %v560, 0
    %v581 = vsel %vm404, %v561, 0
    %v584 = vsel %vm404, %v562, 0
    %586 = vmatprep.subr.mxu0 0.0
    %587 = vmatpush1.msra.mxu0 0.0
    %588 = vmatprep.subr.mxu0 0.0
    %589 = vmatpush1.msra.mxu0 0.0
    %590 = vmatprep.subr.mxu0 0.0
    %591 = vmatpush1.msra.mxu0 0.0
    %592 = vmatprep.subr.mxu0 0.0
    %593 = vmatpush1.msra.mxu0 0.0
    %594 = vmatprep.subr.mxu0 0.0
    %595 = vmatpush1.msra.mxu0 0.0
    %596 = vmatprep.subr.mxu0 0.0
    %597 = vmatpush1.msra.mxu0 0.0
    %598 = vmatprep.subr.mxu0 0.0
    %599 = vmatpush1.msra.mxu0 0.0
    %600 = vmatprep.subr.mxu0 0.0
    %601 = vmatpush1.msra.mxu0 0.0
    %602 = vmatprep.subr.mxu0 0.0
    %603 = vmatpush1.msra.mxu0 0.0
    %604 = vmatprep.subr.mxu0 0.0
    %605 = vmatpush1.msra.mxu0 0.0
    %606 = vmatprep.subr.mxu0 0.0
    %607 = vmatpush1.msra.mxu0 0.0
    %608 = vmatprep.subr.mxu0 0.0
    %609 = vmatpush1.msra.mxu0 0.0
    %610 = vmatprep.subr.mxu0 0.0
    %611 = vmatpush1.msra.mxu0 0.0
    %612 = vmatprep.subr.mxu0 0.0
    %613 = vmatpush1.msra.mxu0 0.0
    %614 = vmatprep.subr.mxu0 0.0
    %615 = vmatpush1.msra.mxu0 0.0
    %616 = vmatprep.subr.mxu0 %v578
    %617 = vmatpush1.msra.mxu0 %v575
    %618 = vmatprep.subr.mxu0 0.0
    %619 = vmatpush2.msra.mxu0 0.0
    %620 = vmatprep.subr.mxu0 0.0
    %621 = vmatpush2.msra.mxu0 0.0
    %622 = vmatprep.subr.mxu0 0.0
    %623 = vmatpush2.msra.mxu0 0.0
    %624 = vmatprep.subr.mxu0 0.0
    %625 = vmatpush2.msra.mxu0 0.0
    %626 = vmatprep.subr.mxu0 0.0
    %627 = vmatpush2.msra.mxu0 0.0
    %628 = vmatprep.subr.mxu0 0.0
    %629 = vmatpush2.msra.mxu0 0.0
    %630 = vmatprep.subr.mxu0 0.0
    %631 = vmatpush2.msra.mxu0 0.0
    %632 = vmatprep.subr.mxu0 0.0
    %633 = vmatpush2.msra.mxu0 0.0
    %634 = vmatprep.subr.mxu0 0.0
    %635 = vmatpush2.msra.mxu0 0.0
    %636 = vmatprep.subr.mxu0 0.0
    %637 = vmatpush2.msra.mxu0 0.0
    %638 = vmatprep.subr.mxu0 0.0
    %639 = vmatpush2.msra.mxu0 0.0
    %640 = vmatprep.subr.mxu0 0.0
    %641 = vmatpush2.msra.mxu0 0.0
    %642 = vmatprep.subr.mxu0 0.0
    %643 = vmatpush2.msra.mxu0 0.0
    %644 = vmatprep.subr.mxu0 0.0
    %645 = vmatpush2.msra.mxu0 0.0
    %646 = vmatprep.subr.mxu0 0.0
    %647 = vmatpush2.msra.mxu0 0.0
    %648 = vmatprep.subr.mxu0 0.0
    %649 = vmatpush2.msra.mxu0 0.0
    %650 = vmatprep.mubr.f32.mxu0 0.0
    %651 = vmatmul.mubr.f32.gmra.mxu0 %v572
    %v652 = vpop.f32.mrf.mxu0
    %v653 = vadd.f32 %v568, %v652
    %v654 = vpop.f32.mrf.mxu0
    %v655 = vadd.f32 %v568, %v654
    %656 = vdwg.mxu0
    %657 = vmatprep.subr.mxu0 0.0
    %658 = vmatpush1.msra.mxu0 0.0
    %659 = vmatprep.subr.mxu0 0.0
    %660 = vmatpush1.msra.mxu0 0.0
    %661 = vmatprep.subr.mxu0 0.0
    %662 = vmatpush1.msra.mxu0 0.0
    %663 = vmatprep.subr.mxu0 0.0
    %664 = vmatpush1.msra.mxu0 0.0
    %665 = vmatprep.subr.mxu0 0.0
    %666 = vmatpush1.msra.mxu0 0.0
    %667 = vmatprep.subr.mxu0 0.0
    %668 = vmatpush1.msra.mxu0 0.0
    %669 = vmatprep.subr.mxu0 0.0
    %670 = vmatpush1.msra.mxu0 0.0
    %671 = vmatprep.subr.mxu0 0.0
    %672 = vmatpush1.msra.mxu0 0.0
    %673 = vmatprep.subr.mxu0 0.0
    %674 = vmatpush1.msra.mxu0 0.0
    %675 = vmatprep.subr.mxu0 0.0
    %676 = vmatpush1.msra.mxu0 0.0
    %677 = vmatprep.subr.mxu0 0.0
    %678 = vmatpush1.msra.mxu0 0.0
    %679 = vmatprep.subr.mxu0 0.0
    %680 = vmatpush1.msra.mxu0 0.0
    %681 = vmatprep.subr.mxu0 0.0
    %682 = vmatpush1.msra.mxu0 0.0
    %683 = vmatprep.subr.mxu0 0.0
    %684 = vmatpush1.msra.mxu0 0.0
    %685 = vmatprep.subr.mxu0 0.0
    %686 = vmatpush1.msra.mxu0 0.0
    %687 = vmatprep.subr.mxu0 %v584
    %688 = vmatpush1.msra.mxu0 %v581
    %689 = vmatprep.subr.mxu0 0.0
    %690 = vmatpush2.msra.mxu0 0.0
    %691 = vmatprep.subr.mxu0 0.0
    %692 = vmatpush2.msra.mxu0 0.0
    %693 = vmatprep.subr.mxu0 0.0
    %694 = vmatpush2.msra.mxu0 0.0
    %695 = vmatprep.subr.mxu0 0.0
    %696 = vmatpush2.msra.mxu0 0.0
    %697 = vmatprep.subr.mxu0 0.0
    %698 = vmatpush2.msra.mxu0 0.0
    %699 = vmatprep.subr.mxu0 0.0
    %700 = vmatpush2.msra.mxu0 0.0
    %701 = vmatprep.subr.mxu0 0.0
    %702 = vmatpush2.msra.mxu0 0.0
    %703 = vmatprep.subr.mxu0 0.0
    %704 = vmatpush2.msra.mxu0 0.0
    %705 = vmatprep.subr.mxu0 0.0
    %706 = vmatpush2.msra.mxu0 0.0
    %707 = vmatprep.subr.mxu0 0.0
    %708 = vmatpush2.msra.mxu0 0.0
    %709 = vmatprep.subr.mxu0 0.0
    %710 = vmatpush2.msra.mxu0 0.0
    %711 = vmatprep.subr.mxu0 0.0
    %712 = vmatpush2.msra.mxu0 0.0
    %713 = vmatprep.subr.mxu0 0.0
    %714 = vmatpush2.msra.mxu0 0.0
    %715 = vmatprep.subr.mxu0 0.0
    %716 = vmatpush2.msra.mxu0 0.0
    %717 = vmatprep.subr.mxu0 0.0
    %718 = vmatpush2.msra.mxu0 0.0
    %719 = vmatprep.subr.mxu0 0.0
    %720 = vmatpush2.msra.mxu0 0.0
    %721 = vmatprep.mubr.f32.mxu0 0.0
    %722 = vmatmul.mubr.f32.gmra.mxu0 %v572
    %v723 = vpop.f32.mrf.mxu0
    %v724 = vadd.f32 %v568, %v723
    %v725 = vpop.f32.mrf.mxu0
    %v726 = vadd.f32 %v568, %v725
    %727 = vdwg.mxu0
    %v728 = vld [vmem:[#allocation3] sm:$0xff]
    %v729 = vld [vmem:[#allocation3 + $0x8] sm:$0xf]
    %v732 = vcombine.high %v728, %v728
    %733 = vrot.lane.b32.xlu0 %v728, 96
    %v734 = vpop.permute.xlu0 %733
    %735 = vrot.lane.b32.xlu0 %v732, 96
    %v736 = vpop.permute.xlu0 %735
    %737 = vrot.lane.b32.xlu0 %v729, 96
    %v738 = vpop.permute.xlu0 %737
    %v739 = vsel %vm158, %v734, %v736
    %v740 = vsel %vm158, %v736, %v738
    %v743 = vadd.f32 %v653, %v739
    %v744 = vadd.f32 %v655, %v740
    %v747 = vcombine.low %v743, %v744
    %749 = vst [vmem:[#allocation6] sm:$0xff] %v747
    %v750 = vld [vmem:[%s227] sm:$0xff]
    %v751 = vld [vmem:[%s227 + $0x8] sm:$0xf]
    %v754 = vcombine.high %v750, %v750
    %755 = vrot.lane.b32.xlu0 %v750, 96
    %v756 = vpop.permute.xlu0 %755
    %757 = vrot.lane.b32.xlu0 %v754, 96
    %v758 = vpop.permute.xlu0 %757
    %759 = vrot.lane.b32.xlu0 %v751, 96
    %v760 = vpop.permute.xlu0 %759
    %v761 = vsel %vm158, %v756, %v758
    %v762 = vsel %vm158, %v758, %v760
    %v765 = vadd.f32 %v724, %v761
    %v766 = vadd.f32 %v726, %v762
    %v769 = vcombine.low %v765, %v766
    %s771 = scalar_lea.vmem [#allocation6], 8
    %772 = vst [vmem:[%s771] sm:$0xff] %v769
    // Predicated region
    $region26: #{tpu_custom_call.1} parent=1 // pred_check
      _
    $region27: #{tpu_custom_call.1} parent=1 // pred_check_branch
      %774 = sbr.rel (0) target = $region29
    $region28: #{tpu_custom_call.1} parent=1 // pred_region
      %s776 = ssub.s32 256, 256
      %777 = vsyncadd [#allocation5], %s776
      %s778 = sshll.u32 [#allocation6], 4
      %s779 = int_to_ptr.vmem [resolvable:$true] %s778
      %784 = dma.vmem_to_hbm [thread:$0]  %s779, 256, %s5, [#allocation5], 128, 128, 8
    $region29: #{tpu_custom_call.1} parent=1 // pred_fallthru
      _
    // Predicated region
    $region30: #{tpu_custom_call.1} parent=1 // pred_check
      _
    $region31: #{tpu_custom_call.1} parent=1 // pred_check_branch
      %786 = sbr.rel (0) target = $region33
    $region32: #{tpu_custom_call.1} parent=1 // pred_region
      %787 = dma.done [#allocation5], 256
    $region33: #{tpu_custom_call.1} parent=1 // pred_fallthru
      _
    %788 = vsyncpa [#allocation4], 1
    %789 = vsyncpa [#allocation5], 1

</llo_original>
